<compile_context>
chip_gen: v7x
topology: tpu7x:2x2x1
jax: 0.10.0
libtpu: 0.0.40
codegen_flags: <defaults>
</compile_context>

<pallas_src>
import functools

import jax
import jax.numpy as jnp
from jax import lax
from jax.experimental import pallas as pl
from jax.experimental.pallas import tpu as pltpu


def _round_up(x, m):
    return ((x + m - 1) // m) * m


def _vmem_capacity_bytes():
    try:
        info = pltpu.get_tpu_info()
        cap = getattr(info, "vmem_capacity_bytes", None)
        if cap:
            return int(cap)
    except Exception:
        pass
    return 64 << 20  # conservative fallback: v7x per-TensorCore VMEM


_VMEM_CAP = _vmem_capacity_bytes()
_HEADROOM = 4 << 20  # Mosaic internal scratch / semaphores / slack


# --------------------------------------------------------------------------- #
# Kernels
# --------------------------------------------------------------------------- #
def _ffn_resident_kernel(x_ref, w1_ref, b1_ref, w2_ref, b2_ref, o_ref, *,
                         compute_dtype):
    # Whole W1/W2 resident in VMEM (constant index_map -> DMA'd once).
    # x_ref: (tm, d_model); w1_ref/w2_ref: (d_ff, d_model)
    # b1_ref: (1, d_ff);    b2_ref: (1, d_model);  o_ref: (tm, d_model)
    h = lax.dot_general(
        x_ref[...].astype(compute_dtype), w1_ref[...].astype(compute_dtype),
        (((1,), (1,)), ((), ())), preferred_element_type=jnp.float32)
    h = jnp.maximum(h + b1_ref[...].astype(jnp.float32), 0.0)
    # dropout: identity (eval mode)
    # TODO(synk): training-mode dropout via pltpu.prng_seed + stateful_bernoulli
    #             with a per-row-tile seed offset to decorrelate masks.
    y = jnp.dot(h.astype(compute_dtype), w2_ref[...].astype(compute_dtype),
                preferred_element_type=jnp.float32)
    o_ref[...] = (y + b2_ref[...].astype(jnp.float32)).astype(o_ref.dtype)


def _ffn_streamed_kernel(x_ref, w1_ref, b1_ref, w2_ref, b2_ref, o_ref,
                         *scratch, tf, compute_dtype):
    # Streams W1/W2 in contiguous (tf, d_model) row chunks along the d_ff grid
    # axis ("arbitrary", last), accumulating the second matmul in f32.  When
    # the output dtype is f32 the output block itself is the accumulator.
    acc_ref = scratch[0] if scratch else o_ref
    j = pl.program_id(1)

    @pl.when(j == 0)
    def _():
        acc_ref[...] = jnp.broadcast_to(
            b2_ref[...].astype(acc_ref.dtype), acc_ref.shape)

    if b1_ref.shape[1] == tf:              # single chunk: whole bias
        b1c = b1_ref[...].astype(jnp.float32)
    else:                                  # tf is a multiple of 128 here
        start = pl.multiple_of(j * tf, 128)
        b1c = b1_ref[:, pl.ds(start, tf)].astype(jnp.float32)

    # (tm, d_model) x (tf, d_model)^T -> (tm, tf); MXU, f32 accumulation.
    h = lax.dot_general(
        x_ref[...].astype(compute_dtype), w1_ref[...].astype(compute_dtype),
        (((1,), (1,)), ((), ())), preferred_element_type=jnp.float32)
    h = jnp.maximum(h + b1c, 0.0)
    # dropout: identity (eval mode)
    # TODO(synk): training-mode dropout (see resident kernel note).

    acc_ref[...] += jnp.dot(
        h.astype(compute_dtype), w2_ref[...].astype(compute_dtype),
        preferred_element_type=jnp.float32).astype(acc_ref.dtype)

    if scratch:  # static: separate f32 accumulator -> single cast at the end
        @pl.when(j == pl.num_programs(1) - 1)
        def _():
            o_ref[...] = acc_ref[...].astype(o_ref.dtype)


# --------------------------------------------------------------------------- #
# Wrapper
# --------------------------------------------------------------------------- #
def _tf_candidates(d_ff, tile_f):
    """128-multiple divisors of d_ff (descending, capped at tile_f)."""
    if d_ff % 128 != 0:
        return [d_ff]
    cap = max(tile_f, 128)
    cands = {128}
    for c in range(128, d_ff + 1, 128):
        if d_ff % c == 0 and c <= cap:
            cands.add(c)
    return sorted(cands, reverse=True)


@functools.partial(
    jax.jit, static_argnames=("tile_m", "tile_f", "compute_dtype", "force_path"))
def positionwise_ffn(x, w1, b1, w2, b2, *, tile_m=1024, tile_f=1024,
                     compute_dtype=None, force_path=None):
    """x: [..., d_model] -> [..., d_model].

    Weight layouts (row-contiguous chunking):
      w1: [d_ff, d_model]  (== torch w_1.weight)
      b1: [d_ff]
      w2: [d_ff, d_model]  (== torch w_2.weight.T)
      b2: [d_model]
    """
    *lead, d_model = x.shape
    d_ff = w1.shape[0]
    m = 1
    for s in lead:
        m *= s

    x_it = jnp.dtype(x.dtype).itemsize
    w_it = jnp.dtype(w1.dtype).itemsize
    cdt = jnp.dtype(compute_dtype) if compute_dtype is not None else jnp.dtype(x.dtype)
    c_it = cdt.itemsize
    need_acc = x.dtype != jnp.float32      # bf16 out -> separate f32 accumulator

    # ---- VMEM budget (generation aware) -----------------------------------
    budget = max(32 << 20, int(_VMEM_CAP * 0.8))
    avail = budget - _HEADROOM

    def resident_bytes(tm):
        return (4 * tm * d_model * x_it          # x + out tiles, double-buffered
                + 4 * d_ff * d_model * w_it      # W1 + W2 (assume 2 bufs each)
                + 4 * (d_ff + d_model) * w_it    # biases
                + tm * d_ff * (4 + c_it))        # f32 hidden act + cast copy

    def streamed_bytes(tm, tf):
        return (4 * tm * d_model * x_it          # x + out tiles
                + (tm * d_model * 4 if need_acc else 0)
                + 4 * tf * d_model * w_it        # W1 + W2 chunks, 2 bufs each
                + 2 * (d_ff + d_model) * w_it    # biases (resident)
                + tm * tf * (4 + c_it))          # f32 hidden act + cast copy

    # ---- row tile: large (amortize grid overhead, feed the MXU) but ensure
    # >= 2 tiles so the "parallel" axis shards across both v7x TensorCores.
    sublane = max(8, 32 // x_it)                 # 8 for f32, 16 for bf16
    tm = min(_round_up(tile_m, sublane), _round_up(m, sublane))
    if m >= 2 * sublane and _round_up(m, tm) // tm < 2:
        tm = _round_up((m + 1) // 2, sublane)

    if force_path is None:
        use_resident = resident_bytes(sublane) <= avail
    else:
        use_resident = force_path == "resident"

    if use_resident:
        while tm > sublane and resident_bytes(tm) > avail:
            tm = max(sublane, _round_up(tm // 2, sublane))
        tf = d_ff
    else:
        tf = d_ff
        for cand in _tf_candidates(d_ff, tile_f):
            tf = cand
            if streamed_bytes(sublane, cand) <= avail:
                break
        while tm > sublane and streamed_bytes(tm, tf) > avail:
            tm = max(sublane, _round_up(tm // 2, sublane))

    m_pad = _round_up(m, tm)
    n_m = m_pad // tm

    x2d = x.reshape(m, d_model)
    if m_pad != m:
        x2d = jnp.pad(x2d, ((0, m_pad - m), (0, 0)))
    b1_2d = b1.reshape(1, d_ff)
    b2_2d = b2.reshape(1, d_model)

    weight_passes = 1 if use_resident else n_m
    cost = pl.CostEstimate(
        flops=2 * 2 * m * d_model * d_ff,
        transcendentals=0,
        bytes_accessed=(2 * m * d_model * x_it
                        + weight_passes * 2 * d_ff * d_model * w_it
                        + (d_ff + d_model) * w_it),
    )

    if use_resident:
        out2d = pl.pallas_call(
            functools.partial(_ffn_resident_kernel, compute_dtype=cdt),
            out_shape=jax.ShapeDtypeStruct((m_pad, d_model), x.dtype),
            grid_spec=pltpu.PrefetchScalarGridSpec(
                num_scalar_prefetch=0,
                grid=(n_m,),
                in_specs=[
                    pl.BlockSpec((tm, d_model), lambda i: (i, 0)),    # x rows
                    pl.BlockSpec((d_ff, d_model), lambda i: (0, 0)),  # W1 resident
                    pl.BlockSpec((1, d_ff), lambda i: (0, 0)),        # b1 resident
                    pl.BlockSpec((d_ff, d_model), lambda i: (0, 0)),  # W2 resident
                    pl.BlockSpec((1, d_model), lambda i: (0, 0)),     # b2
                ],
                out_specs=pl.BlockSpec((tm, d_model), lambda i: (i, 0)),
            ),
            compiler_params=pltpu.CompilerParams(
                dimension_semantics=("parallel",),
                vmem_limit_bytes=budget,
            ),
            cost_estimate=cost,
        )(x2d, w1, b1_2d, w2, b2_2d)
    else:
        n_f = d_ff // tf
        scratch = ([pltpu.VMEM((tm, d_model), jnp.float32)] if need_acc else [])
        out2d = pl.pallas_call(
            functools.partial(_ffn_streamed_kernel, tf=tf, compute_dtype=cdt),
            out_shape=jax.ShapeDtypeStruct((m_pad, d_model), x.dtype),
            grid_spec=pltpu.PrefetchScalarGridSpec(
                num_scalar_prefetch=0,
                grid=(n_m, n_f),
                in_specs=[
                    pl.BlockSpec((tm, d_model), lambda i, j: (i, 0)),  # x rows
                    pl.BlockSpec((tf, d_model), lambda i, j: (j, 0)),  # W1 rows (contig)
                    pl.BlockSpec((1, d_ff), lambda i, j: (0, 0)),      # b1 resident
                    pl.BlockSpec((tf, d_model), lambda i, j: (j, 0)),  # W2 rows (contig)
                    pl.BlockSpec((1, d_model), lambda i, j: (0, 0)),   # b2
                ],
                out_specs=pl.BlockSpec((tm, d_model), lambda i, j: (i, 0)),
                scratch_shapes=scratch,
            ),
            compiler_params=pltpu.CompilerParams(
                dimension_semantics=("parallel", "arbitrary"),
                vmem_limit_bytes=budget,
            ),
            cost_estimate=cost,
        )(x2d, w1, b1_2d, w2, b2_2d)

    if m_pad != m:
        out2d = out2d[:m]
    return out2d.reshape(*lead, d_model)


# --------------------------------------------------------------------------- #
# Params / reference
# --------------------------------------------------------------------------- #
def init_params(key, d_model, d_ff, dtype=jnp.float32):
    """nn.Linear-style init (U[-1/sqrt(fan_in), +1/sqrt(fan_in)]).

    Layouts: w1 [d_ff, d_model] (= torch w_1.weight), b1 [d_ff],
             w2 [d_ff, d_model] (= torch w_2.weight.T), b2 [d_model].
    """
    k1, k2, k3, k4 = jax.random.split(key, 4)
    bound1 = 1.0 / (d_model ** 0.5)
    bound2 = 1.0 / (d_ff ** 0.5)
    w1 = jax.random.uniform(k1, (d_ff, d_model), dtype, -bound1, bound1)
    b1 = jax.random.uniform(k2, (d_ff,), dtype, -bound1, bound1)
    w2 = jax.random.uniform(k3, (d_ff, d_model), dtype, -bound2, bound2)
    b2 = jax.random.uniform(k4, (d_model,), dtype, -bound2, bound2)
    return w1, b1, w2, b2


def _ref_ffn(x, w1, b1, w2, b2):
    x32 = x.astype(jnp.float32)
    h = jnp.maximum(x32 @ w1.astype(jnp.float32).T + b1.astype(jnp.float32), 0.0)
    return h @ w2.astype(jnp.float32) + b2.astype(jnp.float32)


if __name__ == "__main__":
    key = jax.random.PRNGKey(0)
    kx1, kp1, kx2, kp2, kx3, kp3 = jax.random.split(key, 6)

    # 1) tiny f32 problem -> resident-weight fast path (weights DMA'd once).
    b, s, dm, dff = 2, 8, 32, 64
    x = jax.random.normal(kx1, (b, s, dm), jnp.float32)
    p = init_params(kp1, dm, dff)
    out = jax.block_until_ready(positionwise_ffn(x, *p))
    ref = _ref_ffn(x, *p)
    assert out.shape == (b, s, dm)
    assert jnp.allclose(out, ref, atol=1e-4, rtol=1e-4), "resident path mismatch"

    # 2) f32, streamed-d_ff path forced: 2x2 grid, row padding (M=120 -> 128),
    #    accumulation directly in the f32 output block (no scratch).
    b, s, dm, dff = 2, 60, 128, 256
    x = jax.random.normal(kx2, (b, s, dm), jnp.float32)
    p = init_params(kp2, dm, dff)
    out = jax.block_until_ready(
        positionwise_ffn(x, *p, tile_m=64, tile_f=128, force_path="streamed"))
    ref = _ref_ffn(x, *p)
    assert out.shape == (b, s, dm)
    assert jnp.allclose(out, ref, atol=1e-4, rtol=1e-4), "streamed path mismatch"

    # 3) bf16, streamed path with separate f32 accumulator scratch.
    b, s, dm, dff = 2, 16, 128, 256
    x = jax.random.normal(kx3, (b, s, dm), jnp.float32).astype(jnp.bfloat16)
    p = jax.tree_util.tree_map(lambda a: a.astype(jnp.bfloat16),
                               init_params(kp3, dm, dff))
    out = jax.block_until_ready(
        positionwise_ffn(x, *p, tile_f=128, force_path="streamed"))
    ref = _ref_ffn(x, *p)
    assert out.shape == (b, s, dm)
    assert jnp.allclose(out.astype(jnp.float32), ref, atol=2e-2, rtol=2e-2), \
        "bf16 streamed path mismatch"

    print("KERNEL_OK")
</pallas_src>

<mosaic_0001>
module attributes {stable_mosaic.version = 11 : i64} {
  func.func @_ffn_resident_kernel(%arg0: i32, %arg1: memref<8x32xf32, #tpu.memory_space<vmem>>, %arg2: memref<64x32xf32, #tpu.memory_space<vmem>>, %arg3: memref<1x64xf32, #tpu.memory_space<vmem>>, %arg4: memref<64x32xf32, #tpu.memory_space<vmem>>, %arg5: memref<1x32xf32, #tpu.memory_space<vmem>>, %arg6: memref<8x32xf32, #tpu.memory_space<vmem>>) attributes {dimension_semantics = [#tpu.dimension_semantics<parallel>], iteration_bounds = array<i64: 2>, scalar_prefetch = 0 : i64, scratch_operands = 0 : i64, tpu.core_type = #tpu.core_type<tc>, window_params = [{transform_indices = @transform_0, window_bounds = array<i64: 8, 32>}, {pipeline_mode = #tpu.pipeline_mode<synchronous>, transform_indices = @transform_1, window_bounds = array<i64: 64, 32>}, {pipeline_mode = #tpu.pipeline_mode<synchronous>, transform_indices = @transform_2, window_bounds = array<i64: 1, 64>}, {pipeline_mode = #tpu.pipeline_mode<synchronous>, transform_indices = @transform_3, window_bounds = array<i64: 64, 32>}, {pipeline_mode = #tpu.pipeline_mode<synchronous>, transform_indices = @transform_4, window_bounds = array<i64: 1, 32>}, {transform_indices = @transform_5, window_bounds = array<i64: 8, 32>}]} {
    %c0 = arith.constant 0 : index
    %c0_0 = arith.constant 0 : index
    %0 = vector.load %arg1[%c0, %c0_0] : memref<8x32xf32, #tpu.memory_space<vmem>>, vector<8x32xf32>
    %c0_1 = arith.constant 0 : index
    %c0_2 = arith.constant 0 : index
    %1 = vector.load %arg2[%c0_1, %c0_2] : memref<64x32xf32, #tpu.memory_space<vmem>>, vector<64x32xf32>
    %cst = arith.constant dense<0.000000e+00> : vector<8x64xf32>
    %2 = tpu.matmul %0, %1, %cst {dimension_numbers = #tpu.dot_dimension_numbers<[1], [1], [0], [0], [0, 0, 1, 0], [], []>} : vector<8x32xf32>, vector<64x32xf32>, vector<8x64xf32> -> vector<8x64xf32>
    %c0_3 = arith.constant 0 : index
    %c0_4 = arith.constant 0 : index
    %3 = vector.load %arg3[%c0_3, %c0_4] : memref<1x64xf32, #tpu.memory_space<vmem>>, vector<1x64xf32>
    %4 = vector.broadcast %3 : vector<1x64xf32> to vector<8x64xf32>
    %5 = arith.addf %2, %4 : vector<8x64xf32>
    %cst_5 = arith.constant 0.000000e+00 : f32
    %6 = vector.broadcast %cst_5 : f32 to vector<8x64xf32>
    %7 = arith.maximumf %5, %6 : vector<8x64xf32>
    %c0_6 = arith.constant 0 : index
    %c0_7 = arith.constant 0 : index
    %8 = vector.load %arg4[%c0_6, %c0_7] : memref<64x32xf32, #tpu.memory_space<vmem>>, vector<64x32xf32>
    %cst_8 = arith.constant dense<0.000000e+00> : vector<8x32xf32>
    %9 = tpu.matmul %7, %8, %cst_8 {dimension_numbers = #tpu.dot_dimension_numbers<[1], [0], [0], [1], [0, 0, 1, 1], [], []>} : vector<8x64xf32>, vector<64x32xf32>, vector<8x32xf32> -> vector<8x32xf32>
    %c0_9 = arith.constant 0 : index
    %c0_10 = arith.constant 0 : index
    %10 = vector.load %arg5[%c0_9, %c0_10] : memref<1x32xf32, #tpu.memory_space<vmem>>, vector<1x32xf32>
    %11 = vector.broadcast %10 : vector<1x32xf32> to vector<8x32xf32>
    %12 = arith.addf %9, %11 : vector<8x32xf32>
    %c0_11 = arith.constant 0 : index
    %c0_12 = arith.constant 0 : index
    %13 = vector.load %arg6[%c0_11, %c0_12] : memref<8x32xf32, #tpu.memory_space<vmem>>, vector<8x32xf32>
    tpu.vector_store %arg6[%c0_11, %c0_12], %12 {strides = array<i32>} : memref<8x32xf32, #tpu.memory_space<vmem>>, vector<8x32xf32>,
    return
  }
  func.func @transform_0(%arg0: i32) -> (i32, i32) {
    %c0_i32 = arith.constant 0 : i32
    %c0_i32_0 = arith.constant 0 : i32
    return %arg0, %c0_i32 : i32, i32
  }
  func.func @transform_1(%arg0: i32) -> (i32, i32) {
    %c0_i32 = arith.constant 0 : i32
    %c0_i32_0 = arith.constant 0 : i32
    %c0_i32_1 = arith.constant 0 : i32
    return %c0_i32, %c0_i32_0 : i32, i32
  }
  func.func @transform_2(%arg0: i32) -> (i32, i32) {
    %c0_i32 = arith.constant 0 : i32
    %c0_i32_0 = arith.constant 0 : i32
    %c0_i32_1 = arith.constant 0 : i32
    return %c0_i32, %c0_i32_0 : i32, i32
  }
  func.func @transform_3(%arg0: i32) -> (i32, i32) {
    %c0_i32 = arith.constant 0 : i32
    %c0_i32_0 = arith.constant 0 : i32
    %c0_i32_1 = arith.constant 0 : i32
    return %c0_i32, %c0_i32_0 : i32, i32
  }
  func.func @transform_4(%arg0: i32) -> (i32, i32) {
    %c0_i32 = arith.constant 0 : i32
    %c0_i32_0 = arith.constant 0 : i32
    %c0_i32_1 = arith.constant 0 : i32
    return %c0_i32, %c0_i32_0 : i32, i32
  }
  func.func @transform_5(%arg0: i32) -> (i32, i32) {
    %c0_i32 = arith.constant 0 : i32
    %c0_i32_0 = arith.constant 0 : i32
    return %arg0, %c0_i32 : i32, i32
  }
}

</mosaic_0001>

<llo_original>
// kernel: positionwise_ffn.1
$region0: #{positionwise_ffn.1}
  #allocation0 [shape = 'u32[]', space=smem, size = 0x4, offset = 0x4, fixed_abs, tag = 'smem constant byte address 0x4 - core index']
  #allocation1 [shape = 'u32[144,128]{1,0:T(1,128)}', space=vmem, size = 0x12000, scoped, tag = 'internal scratch']
  %s0 = inlined_call_operand.vmem [shape: f32[16,32], index: 0, kind: input, shape index: {}]
  %s1 = inlined_call_operand.vmem [shape: f32[64,32], index: 1, kind: input, shape index: {}]
  %s2 = inlined_call_operand.vmem [shape: f32[1,64], index: 2, kind: input, shape index: {}]
  %s3 = inlined_call_operand.vmem [shape: f32[64,32], index: 3, kind: input, shape index: {}]
  %s4 = inlined_call_operand.vmem [shape: f32[1,32], index: 4, kind: input, shape index: {}]
  %s5 = inlined_call_operand.hbm [shape: f32[16,32], index: 5, kind: output, shape index: {}]
  %s6 = sld [smem:[#allocation0]]
  $region53: #{positionwise_ffn.1} parent=0
    _
  %s8 = ssub.s32 1, %s6
  %s9 = scalar_select 0, %s8, %s6
  $region1: #{positionwise_ffn.1} parent=0
    #allocation2 [shape = 'u8[8192]{0}', space=vmem, size = 0x2000, scoped, tag = 'output window, operand 0']
    #allocation3 [shape = 's32[2]{0}', space=sflag, size = 0x8, scoped, tag = 'scoped memory for positionwise_ffn.1']
    %10 = vsyncpa [#allocation3], 0
    %s11 = scalar_lea.sflag [#allocation3], 1
    %12 = vsyncpa %s11, 0
    loop: start=0, step=1, limit=4
    $region2: #{positionwise_ffn.1} parent=1 // loop_pre_header
      _
    $region3: #{positionwise_ffn.1} parent=1 // loop_header
      %s14 = sphi 0, %s18
      %p15 = scmp.ge.s32.totalorder %s14, 4
      %s24 = sphi 0, %s26
      %s27 = sphi 0, %s24
      %s28 = sphi 0, %s27
      %s44 = sphi 0, %s28
      %s48 = sphi 0, %s48
      %s50 = sphi 0, %s48
      %s51 = sphi 0, %s50
      %s65 = sphi 0, %s51
      %s69 = sphi 0, %s69
      %s71 = sphi 0, %s69
      %s72 = sphi 0, %s71
      %s86 = sphi 0, %s72
      %s90 = sphi 0, %s90
      %s92 = sphi 0, %s90
      %s93 = sphi 0, %s92
      %s107 = sphi 0, %s93
      %s111 = sphi 0, %s111
      %s113 = sphi 0, %s111
      %s114 = sphi 0, %s113
      %s128 = sphi 0, %s114
      %s134 = sphi 0, %s136
      %s137 = sphi 0, %s134
      %s138 = sphi 0, %s137
      %s154 = sphi 0, %s138
    $region4: #{positionwise_ffn.1} parent=1 // loop_header_branch
      %17 = sbr.rel (%p15) target = $region8
    $region5: #{positionwise_ffn.1} parent=1 // loop_body
      %s19 = ssub.s32 %s14, 1
      %s20 = ssub.s32 %s14, 2
      %s21 = sadd.s32 %s14, 1
      %s22 = ssub.s32 %s14, %s21
      %p23 = scmp.eq.s32.totalorder %s22, 0
      %s25 = sadd.s32 %s24, 1
      %s26 = scalar_select %p23, %s24, %s25
      %p29 = pneg %p23
      %p30 = scmp.eq.s32.totalorder %s14, 1
      %p31 = por %p29, %p30
      %p32 = scmp.ne.s32.totalorder %s24, %s27
      %p33 = scmp.eq.s32.totalorder %s14, 0
      %p34 = por %p32, %p33
      %p35 = scmp.ne.s32.totalorder %s24, %s27
      %p36 = scmp.eq.s32.totalorder %s19, 1
      %p37 = por %p35, %p36
      %p38 = scmp.ne.s32.totalorder %s27, %s28
      %p39 = scmp.eq.s32.totalorder %s19, 0
      %p40 = por %p38, %p39
      %p41 = scmp.ne.s32.totalorder %s27, %s28
      %p42 = scmp.eq.s32.totalorder %s20, 1
      %p43 = por %p41, %p42
      %p45 = scmp.ne.s32.totalorder %s28, %s44
      %p46 = scmp.eq.s32.totalorder %s20, 0
      %p47 = por %p45, %p46
      %s49 = sadd.s32 %s48, 1
      %p52 = scmp.eq.s32.totalorder %s14, 1
      %p53 = scmp.ne.s32.totalorder %s48, %s50
      %p54 = scmp.eq.s32.totalorder %s14, 0
      %p55 = por %p53, %p54
      %p56 = scmp.ne.s32.totalorder %s48, %s50
      %p57 = scmp.eq.s32.totalorder %s19, 1
      %p58 = por %p56, %p57
      %p59 = scmp.ne.s32.totalorder %s50, %s51
      %p60 = scmp.eq.s32.totalorder %s19, 0
      %p61 = por %p59, %p60
      %p62 = scmp.ne.s32.totalorder %s50, %s51
      %p63 = scmp.eq.s32.totalorder %s20, 1
      %p64 = por %p62, %p63
      %p66 = scmp.ne.s32.totalorder %s51, %s65
      %p67 = scmp.eq.s32.totalorder %s20, 0
      %p68 = por %p66, %p67
      %s70 = sadd.s32 %s69, 1
      %p73 = scmp.eq.s32.totalorder %s14, 1
      %p74 = scmp.ne.s32.totalorder %s69, %s71
      %p75 = scmp.eq.s32.totalorder %s14, 0
      %p76 = por %p74, %p75
      %p77 = scmp.ne.s32.totalorder %s69, %s71
      %p78 = scmp.eq.s32.totalorder %s19, 1
      %p79 = por %p77, %p78
      %p80 = scmp.ne.s32.totalorder %s71, %s72
      %p81 = scmp.eq.s32.totalorder %s19, 0
      %p82 = por %p80, %p81
      %p83 = scmp.ne.s32.totalorder %s71, %s72
      %p84 = scmp.eq.s32.totalorder %s20, 1
      %p85 = por %p83, %p84
      %p87 = scmp.ne.s32.totalorder %s72, %s86
      %p88 = scmp.eq.s32.totalorder %s20, 0
      %p89 = por %p87, %p88
      %s91 = sadd.s32 %s90, 1
      %p94 = scmp.eq.s32.totalorder %s14, 1
      %p95 = scmp.ne.s32.totalorder %s90, %s92
      %p96 = scmp.eq.s32.totalorder %s14, 0
      %p97 = por %p95, %p96
      %p98 = scmp.ne.s32.totalorder %s90, %s92
      %p99 = scmp.eq.s32.totalorder %s19, 1
      %p100 = por %p98, %p99
      %p101 = scmp.ne.s32.totalorder %s92, %s93
      %p102 = scmp.eq.s32.totalorder %s19, 0
      %p103 = por %p101, %p102
      %p104 = scmp.ne.s32.totalorder %s92, %s93
      %p105 = scmp.eq.s32.totalorder %s20, 1
      %p106 = por %p104, %p105
      %p108 = scmp.ne.s32.totalorder %s93, %s107
      %p109 = scmp.eq.s32.totalorder %s20, 0
      %p110 = por %p108, %p109
      %s112 = sadd.s32 %s111, 1
      %p115 = scmp.eq.s32.totalorder %s14, 1
      %p116 = scmp.ne.s32.totalorder %s111, %s113
      %p117 = scmp.eq.s32.totalorder %s14, 0
      %p118 = por %p116, %p117
      %p119 = scmp.ne.s32.totalorder %s111, %s113
      %p120 = scmp.eq.s32.totalorder %s19, 1
      %p121 = por %p119, %p120
      %p122 = scmp.ne.s32.totalorder %s113, %s114
      %p123 = scmp.eq.s32.totalorder %s19, 0
      %p124 = por %p122, %p123
      %p125 = scmp.ne.s32.totalorder %s113, %s114
      %p126 = scmp.eq.s32.totalorder %s20, 1
      %p127 = por %p125, %p126
      %p129 = scmp.ne.s32.totalorder %s114, %s128
      %p130 = scmp.eq.s32.totalorder %s20, 0
      %p131 = por %p129, %p130
      %s132 = ssub.s32 %s14, %s21
      %p133 = scmp.eq.s32.totalorder %s132, 0
      %s135 = sadd.s32 %s134, 1
      %s136 = scalar_select %p133, %s134, %s135
      %p139 = pneg %p133
      %p140 = scmp.eq.s32.totalorder %s14, 1
      %p141 = por %p139, %p140
      %p142 = scmp.ne.s32.totalorder %s134, %s137
      %p143 = scmp.eq.s32.totalorder %s14, 0
      %p144 = por %p142, %p143
      %p145 = scmp.ne.s32.totalorder %s134, %s137
      %p146 = scmp.eq.s32.totalorder %s19, 1
      %p147 = por %p145, %p146
      %p148 = scmp.ne.s32.totalorder %s137, %s138
      %p149 = scmp.eq.s32.totalorder %s19, 0
      %p150 = por %p148, %p149
      %p151 = scmp.ne.s32.totalorder %s137, %s138
      %p152 = scmp.eq.s32.totalorder %s20, 1
      %p153 = por %p151, %p152
      %p155 = scmp.ne.s32.totalorder %s138, %s154
      %p156 = scmp.eq.s32.totalorder %s20, 0
      %p157 = por %p155, %p156
      %p158 = scmp.le.s32.totalorder 1, %s14
      %p159 = scmp.lt.s32.totalorder %s14, 3
      %p160 = pnand %p158, %p159
      %p161 = pneg %p160
      // Predicated region
      $region9: #{positionwise_ffn.1} parent=5 // pred_check
        _
      $region10: #{positionwise_ffn.1} parent=5 // pred_check_branch
        %163 = sbr.rel (%p160) target = $region12
      $region11: #{positionwise_ffn.1} parent=5 // pred_region
        %s164 = ssub.s32 %s14, 1
        // Predicated region
        $region13: #{positionwise_ffn.1} parent=11 // pred_check
          %p165 = pneg %p61
        $region14: #{positionwise_ffn.1} parent=11 // pred_check_branch
          %167 = sbr.rel (%p165) target = $region16
        $region15: #{positionwise_ffn.1} parent=11 // pred_region
          _
        $region16: #{positionwise_ffn.1} parent=11 // pred_fallthru
          _
        // Predicated region
        $region17: #{positionwise_ffn.1} parent=11 // pred_check
          %p168 = pneg %p82
        $region18: #{positionwise_ffn.1} parent=11 // pred_check_branch
          %170 = sbr.rel (%p168) target = $region20
        $region19: #{positionwise_ffn.1} parent=11 // pred_region
          _
        $region20: #{positionwise_ffn.1} parent=11 // pred_fallthru
          _
        // Predicated region
        $region21: #{positionwise_ffn.1} parent=11 // pred_check
          %p171 = pneg %p103
        $region22: #{positionwise_ffn.1} parent=11 // pred_check_branch
          %173 = sbr.rel (%p171) target = $region24
        $region23: #{positionwise_ffn.1} parent=11 // pred_region
          _
        $region24: #{positionwise_ffn.1} parent=11 // pred_fallthru
          _
        // Predicated region
        $region25: #{positionwise_ffn.1} parent=11 // pred_check
          %p174 = pneg %p124
        $region26: #{positionwise_ffn.1} parent=11 // pred_check_branch
          %176 = sbr.rel (%p174) target = $region28
        $region27: #{positionwise_ffn.1} parent=11 // pred_region
          _
        $region28: #{positionwise_ffn.1} parent=11 // pred_fallthru
          _
      $region12: #{positionwise_ffn.1} parent=5 // pred_fallthru
        _
      %p177 = scmp.lt.s32.totalorder %s14, 2
      // Predicated region
      $region29: #{positionwise_ffn.1} parent=5 // pred_check
        %p178 = pneg %p177
      $region30: #{positionwise_ffn.1} parent=5 // pred_check_branch
        %180 = sbr.rel (%p178) target = $region32
      $region31: #{positionwise_ffn.1} parent=5 // pred_region
        // Predicated region
        $region33: #{positionwise_ffn.1} parent=31 // pred_check
          %p181 = pneg %p34
        $region34: #{positionwise_ffn.1} parent=31 // pred_check_branch
          %183 = sbr.rel (%p181) target = $region36
        $region35: #{positionwise_ffn.1} parent=31 // pred_region
          %p184 = scmp.lt.s32.totalorder %s14, 1
          %s185 = scalar_select %p184, %s14, 1
          %s186 = smul.addr %s185, 8
          %s187 = scalar_lea.vmem %s0, %s186
        $region36: #{positionwise_ffn.1} parent=31 // pred_fallthru
          _
      $region32: #{positionwise_ffn.1} parent=5 // pred_fallthru
        _
      %p188 = scmp.le.s32.totalorder 1, %s14
      %p189 = scmp.lt.s32.totalorder %s14, 3
      %p190 = pnand %p188, %p189
      %p191 = pneg %p190
      // Predicated region
      $region37: #{positionwise_ffn.1} parent=5 // pred_check
        _
      $region38: #{positionwise_ffn.1} parent=5 // pred_check_branch
        %193 = sbr.rel (%p190) target = $region40
      $region39: #{positionwise_ffn.1} parent=5 // pred_region
        %s194 = ssub.s32 %s14, 1
        %p195 = scmp.lt.s32.totalorder %s19, 1
        %s196 = scalar_select %p195, %s19, 1
        %s197 = smul.addr %s196, 8
        %s198 = scalar_lea.vmem %s0, %s197
        %p199 = pneg %p40
        %p200 = pneg %p37
        %p201 = pneg %p61
        %p202 = pneg %p58
        %p203 = pneg %p82
        %p204 = pneg %p79
        %p205 = pneg %p103
        %p206 = pneg %p100
        %p207 = pneg %p124
        %p208 = pneg %p121
        %p209 = pneg %p150
        %p210 = pneg %p147
        %s211 = sand.u32 %s137, 1
        %s212 = scalar_lea.sflag [#allocation3], %s211
        %s213 = sand.u32 %s137, 1
        %s214 = smul.addr %s213, 8
        %s215 = scalar_lea.vmem [#allocation2], %s214
        %p216 = scmp.lt.s32.totalorder %s19, 1
        %s217 = scalar_select %p216, %s19, 1
        %s218 = smul.addr %s217, 8
        %s219 = scalar_lea.vmem %s0, %s218
        %v220 = vld [vmem:[%s219] sm:$0xff]
        %v221 = vld [vmem:[%s1] sm:$0xff]
        %v222 = vld [vmem:[%s1 + $0x8] sm:$0xff]
        %v223 = vld [vmem:[%s1 + $0x10] sm:$0xff]
        %v224 = vld [vmem:[%s1 + $0x18] sm:$0xff]
        %v225 = vld [vmem:[%s1 + $0x20] sm:$0xff]
        %v226 = vld [vmem:[%s1 + $0x28] sm:$0xff]
        %v227 = vld [vmem:[%s1 + $0x30] sm:$0xff]
        %v228 = vld [vmem:[%s1 + $0x38] sm:$0xff]
        %v229 = vld [vmem:[%s2] sm:$0x1]
        %v231 = vlaneseq
        %v232 = vshrl.u32 %v231, 7
        %v233 = vsub.s32 0, %v232
        %v234 = vrot.slane %v229, %v233
        %vm236 = vcmask 261120
        %v238 = vsel %vm236, %v220, 0
        %v241 = vsel %vm236, %v221, 0
        %v244 = vsel %vm236, %v222, 0
        %v247 = vsel %vm236, %v223, 0
        %v250 = vsel %vm236, %v224, 0
        %v253 = vsel %vm236, %v225, 0
        %v256 = vsel %vm236, %v226, 0
        %v259 = vsel %vm236, %v227, 0
        %v262 = vsel %vm236, %v228, 0
        %264 = vmatprep.subr.mxu0 0.0
        %265 = vmatpush1.xpose.msra.mxu0 %v241
        %266 = vmatprep.subr.mxu0 0.0
        %267 = vmatpush1.xpose.msra.mxu0 %v244
        %268 = vmatprep.subr.mxu0 0.0
        %269 = vmatpush1.xpose.msra.mxu0 %v247
        %270 = vmatprep.subr.mxu0 0.0
        %271 = vmatpush1.xpose.msra.mxu0 %v250
        %272 = vmatprep.subr.mxu0 0.0
        %273 = vmatpush1.xpose.msra.mxu0 %v253
        %274 = vmatprep.subr.mxu0 0.0
        %275 = vmatpush1.xpose.msra.mxu0 %v256
        %276 = vmatprep.subr.mxu0 0.0
        %277 = vmatpush1.xpose.msra.mxu0 %v259
        %278 = vmatprep.subr.mxu0 0.0
        %279 = vmatpush1.xpose.msra.mxu0 %v262
        %280 = vmatprep.subr.mxu0 0.0
        %281 = vmatpush1.xpose.msra.mxu0 0.0
        %282 = vmatprep.subr.mxu0 0.0
        %283 = vmatpush1.xpose.msra.mxu0 0.0
        %284 = vmatprep.subr.mxu0 0.0
        %285 = vmatpush1.xpose.msra.mxu0 0.0
        %286 = vmatprep.subr.mxu0 0.0
        %287 = vmatpush1.xpose.msra.mxu0 0.0
        %288 = vmatprep.subr.mxu0 0.0
        %289 = vmatpush1.xpose.msra.mxu0 0.0
        %290 = vmatprep.subr.mxu0 0.0
        %291 = vmatpush1.xpose.msra.mxu0 0.0
        %292 = vmatprep.subr.mxu0 0.0
        %293 = vmatpush1.xpose.msra.mxu0 0.0
        %294 = vmatprep.subr.mxu0 0.0
        %295 = vmatpush1.xpose.msra.mxu0 0.0
        %296 = vmatprep.subr.mxu0 0.0
        %297 = vmatpush1.xpose.msra.mxu0 0.0
        %298 = vmatprep.subr.mxu0 0.0
        %299 = vmatpush1.xpose.msra.mxu0 0.0
        %300 = vmatprep.subr.mxu0 0.0
        %301 = vmatpush1.xpose.msra.mxu0 0.0
        %302 = vmatprep.subr.mxu0 0.0
        %303 = vmatpush1.xpose.msra.mxu0 0.0
        %304 = vmatprep.subr.mxu0 0.0
        %305 = vmatpush1.xpose.msra.mxu0 0.0
        %306 = vmatprep.subr.mxu0 0.0
        %307 = vmatpush1.xpose.msra.mxu0 0.0
        %308 = vmatprep.subr.mxu0 0.0
        %309 = vmatpush1.xpose.msra.mxu0 0.0
        %310 = vmatprep.subr.mxu0 0.0
        %311 = vmatpush1.xpose.msra.mxu0 0.0
        %312 = vmatprep.subr.mxu0 0.0
        %313 = vmatpush1.xpose.msra.mxu0 0.0
        %314 = vmatprep.subr.mxu0 0.0
        %315 = vmatpush1.xpose.msra.mxu0 0.0
        %316 = vmatprep.subr.mxu0 0.0
        %317 = vmatpush1.xpose.msra.mxu0 0.0
        %318 = vmatprep.subr.mxu0 0.0
        %319 = vmatpush1.xpose.msra.mxu0 0.0
        %320 = vmatprep.subr.mxu0 0.0
        %321 = vmatpush1.xpose.msra.mxu0 0.0
        %322 = vmatprep.subr.mxu0 0.0
        %323 = vmatpush1.xpose.msra.mxu0 0.0
        %324 = vmatprep.subr.mxu0 0.0
        %325 = vmatpush1.xpose.msra.mxu0 0.0
        %326 = vmatprep.subr.mxu0 0.0
        %327 = vmatpush1.xpose.msra.mxu0 0.0
        %328 = vmatprep.mubr.f32.mxu0 0.0
        %329 = vmatmul.mubr.f32.gmra.mrb[0].mxu0 %v238
        %v330 = vpop.f32.mrb[0].mxu0
        %v331 = vadd.f32 %v234, %v330
        %v332 = vpop.f32.mrb[0].mxu0
        %333 = vdwg.mxu0
        %v334 = vmax.f32 %v331, 0.0
        %v335 = vld [vmem:[%s3] sm:$0xff]
        %v336 = vld [vmem:[%s3 + $0x8] sm:$0xff]
        %v337 = vld [vmem:[%s3 + $0x10] sm:$0xff]
        %v338 = vld [vmem:[%s3 + $0x18] sm:$0xff]
        %v339 = vld [vmem:[%s3 + $0x20] sm:$0xff]
        %v340 = vld [vmem:[%s3 + $0x28] sm:$0xff]
        %v341 = vld [vmem:[%s3 + $0x30] sm:$0xff]
        %v342 = vld [vmem:[%s3 + $0x38] sm:$0xff]
        %v343 = vld [vmem:[%s4] sm:$0x1]
        %v345 = vlaneseq
        %v346 = vshrl.u32 %v345, 7
        %v347 = vsub.s32 0, %v346
        %v348 = vrot.slane %v343, %v347
        %vm350 = vcmask 523264
        %v352 = vsel %vm350, %v334, 0
        %354 = vmatprep.subr.mxu0 0.0
        %355 = vmatpush1.msra.mxu0 %v335
        %356 = vmatprep.subr.mxu0 0.0
        %357 = vmatpush1.msra.mxu0 %v336
        %358 = vmatprep.subr.mxu0 0.0
        %359 = vmatpush1.msra.mxu0 %v337
        %360 = vmatprep.subr.mxu0 0.0
        %361 = vmatpush1.msra.mxu0 %v338
        %362 = vmatprep.subr.mxu0 0.0
        %363 = vmatpush1.msra.mxu0 %v339
        %364 = vmatprep.subr.mxu0 0.0
        %365 = vmatpush1.msra.mxu0 %v340
        %366 = vmatprep.subr.mxu0 0.0
        %367 = vmatpush1.msra.mxu0 %v341
        %368 = vmatprep.subr.mxu0 0.0
        %369 = vmatpush1.msra.mxu0 %v342
        %370 = vmatprep.subr.mxu0 0.0
        %371 = vmatpush1.msra.mxu0 0.0
        %372 = vmatprep.subr.mxu0 0.0
        %373 = vmatpush1.msra.mxu0 0.0
        %374 = vmatprep.subr.mxu0 0.0
        %375 = vmatpush1.msra.mxu0 0.0
        %376 = vmatprep.subr.mxu0 0.0
        %377 = vmatpush1.msra.mxu0 0.0
        %378 = vmatprep.subr.mxu0 0.0
        %379 = vmatpush1.msra.mxu0 0.0
        %380 = vmatprep.subr.mxu0 0.0
        %381 = vmatpush1.msra.mxu0 0.0
        %382 = vmatprep.subr.mxu0 0.0
        %383 = vmatpush1.msra.mxu0 0.0
        %384 = vmatprep.subr.mxu0 0.0
        %385 = vmatpush1.msra.mxu0 0.0
        %386 = vmatprep.subr.mxu0 0.0
        %387 = vmatpush1.msra.mxu0 0.0
        %388 = vmatprep.subr.mxu0 0.0
        %389 = vmatpush1.msra.mxu0 0.0
        %390 = vmatprep.subr.mxu0 0.0
        %391 = vmatpush1.msra.mxu0 0.0
        %392 = vmatprep.subr.mxu0 0.0
        %393 = vmatpush1.msra.mxu0 0.0
        %394 = vmatprep.subr.mxu0 0.0
        %395 = vmatpush1.msra.mxu0 0.0
        %396 = vmatprep.subr.mxu0 0.0
        %397 = vmatpush1.msra.mxu0 0.0
        %398 = vmatprep.subr.mxu0 0.0
        %399 = vmatpush1.msra.mxu0 0.0
        %400 = vmatprep.subr.mxu0 0.0
        %401 = vmatpush1.msra.mxu0 0.0
        %402 = vmatprep.subr.mxu0 0.0
        %403 = vmatpush1.msra.mxu0 0.0
        %404 = vmatprep.subr.mxu0 0.0
        %405 = vmatpush1.msra.mxu0 0.0
        %406 = vmatprep.subr.mxu0 0.0
        %407 = vmatpush1.msra.mxu0 0.0
        %408 = vmatprep.subr.mxu0 0.0
        %409 = vmatpush1.msra.mxu0 0.0
        %410 = vmatprep.subr.mxu0 0.0
        %411 = vmatpush1.msra.mxu0 0.0
        %412 = vmatprep.subr.mxu0 0.0
        %413 = vmatpush1.msra.mxu0 0.0
        %414 = vmatprep.subr.mxu0 0.0
        %415 = vmatpush1.msra.mxu0 0.0
        %416 = vmatprep.subr.mxu0 0.0
        %417 = vmatpush1.msra.mxu0 0.0
        %418 = vmatprep.mubr.f32.mxu0 0.0
        %419 = vmatmul.mubr.f32.gmra.mrb[0].mxu0 %v352
        %v420 = vpop.f32.mrb[0].mxu0
        %v421 = vadd.f32 %v348, %v420
        %v422 = vpop.f32.mrb[0].mxu0
        %423 = vdwg.mxu0
        %424 = vst.msk [vmem:[%s215] sm:$0xff] %vm236, %v421
        %s425 = sand.u32 %s137, 1
        %s426 = scalar_lea.sflag [#allocation3], %s425
        %s427 = sand.u32 %s137, 1
        %s428 = smul.addr %s427, 8
        %s429 = scalar_lea.vmem [#allocation2], %s428
        // Predicated region
        $region41: #{positionwise_ffn.1} parent=39 // pred_check
          %p430 = pneg %p147
        $region42: #{positionwise_ffn.1} parent=39 // pred_check_branch
          %432 = sbr.rel (%p430) target = $region44
        $region43: #{positionwise_ffn.1} parent=39 // pred_region
          %s434 = ssub.s32 128, 128
          %435 = vsyncadd %s426, %s434
          %s436 = smul.addr %s19, 128
          %s437 = scalar_lea.hbm %s5, %s436
          %s439 = sshll.u32 %s429, 4
          %s440 = int_to_ptr.vmem [resolvable:$true] %s439
          %442 = dma.vmem_to_hbm [thread:$0]  %s440, 128, %s437, %s426
        $region44: #{positionwise_ffn.1} parent=39 // pred_fallthru
          _
      $region40: #{positionwise_ffn.1} parent=5 // pred_fallthru
        _
      %p443 = scmp.le.s32.totalorder 2, %s14
      // Predicated region
      $region45: #{positionwise_ffn.1} parent=5 // pred_check
        %p444 = pneg %p443
      $region46: #{positionwise_ffn.1} parent=5 // pred_check_branch
        %446 = sbr.rel (%p444) target = $region48
      $region47: #{positionwise_ffn.1} parent=5 // pred_region
        %s447 = ssub.s32 %s14, 2
        // Predicated region
        $region49: #{positionwise_ffn.1} parent=47 // pred_check
          %p448 = pneg %p153
        $region50: #{positionwise_ffn.1} parent=47 // pred_check_branch
          %450 = sbr.rel (%p448) target = $region52
        $region51: #{positionwise_ffn.1} parent=47 // pred_region
          %s451 = sand.u32 %s138, 1
          %s452 = scalar_lea.sflag [#allocation3], %s451
          %s453 = sand.u32 %s138, 1
          %s454 = smul.addr %s453, 8
          %s455 = scalar_lea.vmem [#allocation2], %s454
          %456 = dma.done %s452, 128
        $region52: #{positionwise_ffn.1} parent=47 // pred_fallthru
          _
      $region48: #{positionwise_ffn.1} parent=5 // pred_fallthru
        _
    $region6: #{positionwise_ffn.1} parent=1 // loop_footer
      %s18 = sadd.s32 1, %s14
    $region7: #{positionwise_ffn.1} parent=1 // loop_footer_branch
      %13 = sbr.rel target = $region3
    $region8: #{positionwise_ffn.1} parent=1 // loop_exit
      _
    %457 = vsyncpa [#allocation3], 1
    %s458 = scalar_lea.sflag [#allocation3], 1
    %459 = vsyncpa %s458, 1

</llo_original>
